<compile_context>
chip_gen: v7x
topology: tpu7x:2x2x1
jax: 0.10.0
libtpu: 0.0.40
codegen_flags: <defaults>
</compile_context>

<pallas_src>
import functools
import math
from typing import NamedTuple

import jax
import jax.numpy as jnp
from jax.experimental import pallas as pl
from jax.experimental.pallas import tpu as pltpu


def _round_up(x: int, m: int) -> int:
    return ((x + m - 1) // m) * m


class NumberConditionerParams(NamedTuple):
    """One-time packed parameters (build once at init; do NOT rebuild per forward call)."""
    fw_scaled: jax.Array   # (1, 2H)
    phase: jax.Array       # (1, 2H)
    w_x: jax.Array         # (1, F)
    w_sc: jax.Array        # (2H, F)
    bias: jax.Array        # (1, F)
    min_val: float
    max_val: float


def pack_number_conditioner_params(freq_w, w_lin_t, b_lin,
                                   min_val: float = 0.0,
                                   max_val: float = 1.0) -> NumberConditionerParams:
    """Hoisted init-time packing.

    freq_w : (H,)        LearnedPositionalEmbedding.weights
    w_lin_t: (2H+1, F)   torch Linear(dim+1, F).weight transposed
    b_lin  : (F,)        Linear bias
    """
    min_val = float(min_val)
    max_val = float(max_val)
    if max_val == min_val:
        raise ValueError("max_val must differ from min_val (normalization divides by the range).")
    inv_range = 1.0 / (max_val - min_val)

    freq_w = jnp.asarray(freq_w, jnp.float32)
    w_lin_t = jnp.asarray(w_lin_t, jnp.float32)
    b_lin = jnp.asarray(b_lin, jnp.float32)
    H = freq_w.shape[0]
    F = w_lin_t.shape[1]

    # Duplicate the freq row so ONE sin pass (and one fused K=2H matmul) covers sin+cos:
    # cos(t) == sin(t + pi/2) -> the second half of the lanes carries a +pi/2 phase.
    fw_scaled = (jnp.concatenate([freq_w, freq_w]) * (2.0 * math.pi * inv_range)
                 ).reshape(1, 2 * H)
    phase = jnp.concatenate([jnp.zeros((H,), jnp.float32),
                             jnp.full((H,), math.pi / 2.0, jnp.float32)]).reshape(1, 2 * H)
    w_x = w_lin_t[0:1, :] * inv_range     # value row with the normalization folded in
    w_sc = w_lin_t[1:, :]                 # (2H, F), torch [sin, cos] order
    bias = b_lin.reshape(1, F)
    return NumberConditionerParams(fw_scaled, phase, w_x, w_sc, bias, min_val, max_val)


def _number_conditioner_kernel(min_val, max_val,
                               x_ref, fw_ref, ph_ref, wx_ref, wsc_ref, b_ref, emb_ref):
    # Clip bounds are trace-time constants; normalization is folded into fw_ref / wx_ref.
    xc = jnp.clip(x_ref[...], min_val, max_val) - min_val                  # (bm, 1)
    # One sin pass yields [sin, cos]: freq row already includes 2*pi/(max-min); phase row is
    # 0 on the sin half and pi/2 on the cos half (precomputed, pinned input).
    sc = jnp.sin(xc * fw_ref[...] + ph_ref[...])                           # (bm, 2H)
    # Linear(2H+1 -> F): rank-1 value term (normalization folded into wx) + one fused K=2H
    # matmul (native MXU width on v6e/v7x; two passes on v5e's 128x128 MXU — fine either way).
    out = (xc * wx_ref[...]
           + jnp.dot(sc, wsc_ref[...], preferred_element_type=jnp.float32)
           + b_ref[...])
    emb_ref[...] = out.astype(emb_ref.dtype)


def _choose_bm(B8: int, H: int, F: int) -> int:
    # v7x has 2 TensorCores: aim for >= 2 "parallel" grid steps once there is enough batch
    # (no effect on single-TC v5e/v6e beyond a slightly smaller tile).
    bm = B8 if B8 < 16 else min(256, _round_up((B8 + 1) // 2, 8))
    # Generic-F VMEM guard: default double-buffering holds 2x every tile (weights included);
    # keep the footprint well under the smallest scoped-VMEM default (16 MiB on v5e).
    budget = 12 * 1024 * 1024
    weight_bytes = 2 * 4 * (2 * (2 * H) + 2 * F + 2 * H * F)   # fw, ph, wx, bias, wsc (x2 bufs)
    per_row_bytes = 2 * 4 * (1 + F)                            # x row + out row (x2 bufs)
    cap = (budget - weight_bytes) // per_row_bytes if budget > weight_bytes else 8
    cap = max(8, (cap // 8) * 8)
    return max(8, min(bm, cap))


def number_conditioner_forward(floats, params: NumberConditionerParams):
    """floats: (B,) f32 -> [embeds (B, 1, F), ones (B, 1)] (NumberConditioner.forward)."""
    floats = jnp.asarray(floats, jnp.float32)
    B = floats.shape[0]
    H2 = params.fw_scaled.shape[1]           # 2H
    H = H2 // 2
    F = params.w_sc.shape[1]

    B8 = _round_up(max(B, 1), 8)
    bm = _choose_bm(B8, H, F)
    Bp = _round_up(B8, bm)

    x = floats.reshape(B, 1)
    if Bp > B:
        x = jnp.pad(x, ((0, Bp - B), (0, 0)))

    kernel = functools.partial(_number_conditioner_kernel, params.min_val, params.max_val)

    emb = pl.pallas_call(
        kernel,
        out_shape=jax.ShapeDtypeStruct((Bp, F), jnp.float32),
        grid=(Bp // bm,),
        in_specs=[
            pl.BlockSpec((bm, 1), lambda i: (i, 0)),     # floats (batch-tiled)
            pl.BlockSpec((1, H2), lambda i: (0, 0)),     # scaled duplicated freq row (pinned)
            pl.BlockSpec((1, H2), lambda i: (0, 0)),     # phase row (pinned)
            pl.BlockSpec((1, F), lambda i: (0, 0)),      # value row of the Linear (pinned)
            pl.BlockSpec((H2, F), lambda i: (0, 0)),     # [sin, cos] rows of the Linear (pinned)
            pl.BlockSpec((1, F), lambda i: (0, 0)),      # bias (pinned)
        ],
        out_specs=pl.BlockSpec((bm, F), lambda i: (i, 0)),
        compiler_params=pltpu.CompilerParams(dimension_semantics=("parallel",)),
    )(x, params.fw_scaled, params.phase, params.w_x, params.w_sc, params.bias)

    if Bp > B:
        emb = emb[:B]
    embeds = emb.reshape(B, 1, F)            # metadata-only under XLA
    ones = jnp.ones((B, 1), jnp.float32)     # compile-time constant under jit
    return [embeds, ones]


if __name__ == "__main__":
    # Small, forward-consistent shapes.
    B = 8            # number of conditioning floats
    OUTPUT_DIM = 32  # NumberConditioner(output_dim)
    DIM = 256        # NumberEmbedder internal fourier dim (a-unet default)
    H = DIM // 2
    MIN_VAL, MAX_VAL = 0.0, 1.0

    key = jax.random.PRNGKey(0)
    k_in, k_fw, k_w, k_b = jax.random.split(key, 4)

    # Inputs: include values outside [min, max] to exercise the clamp.
    floats = jax.random.uniform(k_in, (B,), minval=-0.5, maxval=1.5, dtype=jnp.float32)

    # Deterministic synthetic parameters (shapes from the module's __init__):
    #   LearnedPositionalEmbedding.weights : (H,)          ~ randn
    #   Linear(DIM + 1, OUTPUT_DIM).weight : (OUTPUT_DIM, DIM+1) -> stored transposed (DIM+1, F)
    #   Linear bias                        : (OUTPUT_DIM,)
    freq_w = jax.random.normal(k_fw, (H,), dtype=jnp.float32)
    lin_bound = 1.0 / math.sqrt(DIM + 1)
    w_lin_t = jax.random.uniform(k_w, (DIM + 1, OUTPUT_DIM),
                                 minval=-lin_bound, maxval=lin_bound, dtype=jnp.float32)
    b_lin = jax.random.uniform(k_b, (OUTPUT_DIM,),
                               minval=-lin_bound, maxval=lin_bound, dtype=jnp.float32)

    # One-time packing (init), then a jitted forward: the reshape / ones / any batch slice are
    # folded by XLA, so the per-call work is essentially the single pallas_call dispatch.
    params = pack_number_conditioner_params(freq_w, w_lin_t, b_lin, MIN_VAL, MAX_VAL)
    forward = jax.jit(lambda f: number_conditioner_forward(f, params))

    embeds, ones = forward(floats)
    jax.block_until_ready(embeds)
    jax.block_until_ready(ones)

    # Pure-JAX reference check of the same math (with a true cos).
    xn_ref = (jnp.clip(floats, MIN_VAL, MAX_VAL) - MIN_VAL) / (MAX_VAL - MIN_VAL)
    fr = xn_ref[:, None] * freq_w[None, :] * 2.0 * math.pi
    fouriered = jnp.concatenate([xn_ref[:, None], jnp.sin(fr), jnp.cos(fr)], axis=-1)
    ref = (fouriered @ w_lin_t + b_lin)[:, None, :]
    assert embeds.shape == (B, 1, OUTPUT_DIM) and ones.shape == (B, 1)
    assert jnp.allclose(embeds, ref, atol=1e-4, rtol=1e-4)
    assert jnp.all(ones == 1.0)

    print("KERNEL_OK")
</pallas_src>

<mosaic_0001>
module attributes {stable_mosaic.version = 11 : i64} {
  func.func @_number_conditioner_kernel(%arg0: i32, %arg1: memref<8x1xf32, #tpu.memory_space<vmem>>, %arg2: memref<1x256xf32, #tpu.memory_space<vmem>>, %arg3: memref<1x256xf32, #tpu.memory_space<vmem>>, %arg4: memref<1x32xf32, #tpu.memory_space<vmem>>, %arg5: memref<256x32xf32, #tpu.memory_space<vmem>>, %arg6: memref<1x32xf32, #tpu.memory_space<vmem>>, %arg7: memref<8x32xf32, #tpu.memory_space<vmem>>) attributes {dimension_semantics = [#tpu.dimension_semantics<parallel>], iteration_bounds = array<i64: 1>, scalar_prefetch = 0 : i64, scratch_operands = 0 : i64, tpu.core_type = #tpu.core_type<tc>, window_params = [{transform_indices = @transform_0, window_bounds = array<i64: 8, 1>}, {pipeline_mode = #tpu.pipeline_mode<synchronous>, transform_indices = @transform_1, window_bounds = array<i64: 1, 256>}, {pipeline_mode = #tpu.pipeline_mode<synchronous>, transform_indices = @transform_2, window_bounds = array<i64: 1, 256>}, {pipeline_mode = #tpu.pipeline_mode<synchronous>, transform_indices = @transform_3, window_bounds = array<i64: 1, 32>}, {pipeline_mode = #tpu.pipeline_mode<synchronous>, transform_indices = @transform_4, window_bounds = array<i64: 256, 32>}, {pipeline_mode = #tpu.pipeline_mode<synchronous>, transform_indices = @transform_5, window_bounds = array<i64: 1, 32>}, {transform_indices = @transform_6, window_bounds = array<i64: 8, 32>}]} {
    %c0 = arith.constant 0 : index
    %c0_0 = arith.constant 0 : index
    %0 = vector.load %arg1[%c0, %c0_0] : memref<8x1xf32, #tpu.memory_space<vmem>>, vector<8x1xf32>
    %cst = arith.constant 0.000000e+00 : f32
    %cst_1 = arith.constant 1.000000e+00 : f32
    %1 = vector.broadcast %cst : f32 to vector<8x1xf32>
    %2 = arith.maximumf %1, %0 : vector<8x1xf32>
    %3 = vector.broadcast %cst_1 : f32 to vector<8x1xf32>
    %4 = arith.minimumf %3, %2 : vector<8x1xf32>
    %cst_2 = arith.constant 0.000000e+00 : f32
    %5 = vector.broadcast %cst_2 : f32 to vector<8x1xf32>
    %6 = arith.subf %4, %5 : vector<8x1xf32>
    %c0_3 = arith.constant 0 : index
    %c0_4 = arith.constant 0 : index
    %7 = vector.load %arg2[%c0_3, %c0_4] : memref<1x256xf32, #tpu.memory_space<vmem>>, vector<1x256xf32>
    %8 = vector.broadcast %6 : vector<8x1xf32> to vector<8x256xf32>
    %9 = vector.broadcast %7 : vector<1x256xf32> to vector<8x256xf32>
    %10 = arith.mulf %8, %9 : vector<8x256xf32>
    %c0_5 = arith.constant 0 : index
    %c0_6 = arith.constant 0 : index
    %11 = vector.load %arg3[%c0_5, %c0_6] : memref<1x256xf32, #tpu.memory_space<vmem>>, vector<1x256xf32>
    %12 = vector.broadcast %11 : vector<1x256xf32> to vector<8x256xf32>
    %13 = arith.addf %10, %12 : vector<8x256xf32>
    %14 = math.sin %13 : vector<8x256xf32>
    %c0_7 = arith.constant 0 : index
    %c0_8 = arith.constant 0 : index
    %15 = vector.load %arg4[%c0_7, %c0_8] : memref<1x32xf32, #tpu.memory_space<vmem>>, vector<1x32xf32>
    %16 = vector.broadcast %6 : vector<8x1xf32> to vector<8x32xf32>
    %17 = vector.broadcast %15 : vector<1x32xf32> to vector<8x32xf32>
    %18 = arith.mulf %16, %17 : vector<8x32xf32>
    %c0_9 = arith.constant 0 : index
    %c0_10 = arith.constant 0 : index
    %19 = vector.load %arg5[%c0_9, %c0_10] : memref<256x32xf32, #tpu.memory_space<vmem>>, vector<256x32xf32>
    %cst_11 = arith.constant dense<0.000000e+00> : vector<8x32xf32>
    %20 = tpu.matmul %14, %19, %cst_11 {dimension_numbers = #tpu.dot_dimension_numbers<[1], [0], [0], [1], [0, 0, 1, 1], [], []>} : vector<8x256xf32>, vector<256x32xf32>, vector<8x32xf32> -> vector<8x32xf32>
    %21 = arith.addf %18, %20 : vector<8x32xf32>
    %c0_12 = arith.constant 0 : index
    %c0_13 = arith.constant 0 : index
    %22 = vector.load %arg6[%c0_12, %c0_13] : memref<1x32xf32, #tpu.memory_space<vmem>>, vector<1x32xf32>
    %23 = vector.broadcast %22 : vector<1x32xf32> to vector<8x32xf32>
    %24 = arith.addf %21, %23 : vector<8x32xf32>
    %c0_14 = arith.constant 0 : index
    %c0_15 = arith.constant 0 : index
    %25 = vector.load %arg7[%c0_14, %c0_15] : memref<8x32xf32, #tpu.memory_space<vmem>>, vector<8x32xf32>
    tpu.vector_store %arg7[%c0_14, %c0_15], %24 {strides = array<i32>} : memref<8x32xf32, #tpu.memory_space<vmem>>, vector<8x32xf32>,
    return
  }
  func.func @transform_0(%arg0: i32) -> (i32, i32) {
    %c0_i32 = arith.constant 0 : i32
    %c0_i32_0 = arith.constant 0 : i32
    return %arg0, %c0_i32 : i32, i32
  }
  func.func @transform_1(%arg0: i32) -> (i32, i32) {
    %c0_i32 = arith.constant 0 : i32
    %c0_i32_0 = arith.constant 0 : i32
    %c0_i32_1 = arith.constant 0 : i32
    return %c0_i32, %c0_i32_0 : i32, i32
  }
  func.func @transform_2(%arg0: i32) -> (i32, i32) {
    %c0_i32 = arith.constant 0 : i32
    %c0_i32_0 = arith.constant 0 : i32
    %c0_i32_1 = arith.constant 0 : i32
    return %c0_i32, %c0_i32_0 : i32, i32
  }
  func.func @transform_3(%arg0: i32) -> (i32, i32) {
    %c0_i32 = arith.constant 0 : i32
    %c0_i32_0 = arith.constant 0 : i32
    %c0_i32_1 = arith.constant 0 : i32
    return %c0_i32, %c0_i32_0 : i32, i32
  }
  func.func @transform_4(%arg0: i32) -> (i32, i32) {
    %c0_i32 = arith.constant 0 : i32
    %c0_i32_0 = arith.constant 0 : i32
    %c0_i32_1 = arith.constant 0 : i32
    return %c0_i32, %c0_i32_0 : i32, i32
  }
  func.func @transform_5(%arg0: i32) -> (i32, i32) {
    %c0_i32 = arith.constant 0 : i32
    %c0_i32_0 = arith.constant 0 : i32
    %c0_i32_1 = arith.constant 0 : i32
    return %c0_i32, %c0_i32_0 : i32, i32
  }
  func.func @transform_6(%arg0: i32) -> (i32, i32) {
    %c0_i32 = arith.constant 0 : i32
    %c0_i32_0 = arith.constant 0 : i32
    return %arg0, %c0_i32 : i32, i32
  }
}

</mosaic_0001>

<llo_original>
// kernel: _lambda_.1
$region0: #{_lambda_.1}
  #allocation0 [shape = 'u32[]', space=smem, size = 0x4, offset = 0x4, fixed_abs, tag = 'smem constant byte address 0x4 - core index']
  #allocation1 [shape = 'u32[144,128]{1,0:T(1,128)}', space=vmem, size = 0x12000, scoped, tag = 'internal scratch']
  %s0 = inlined_call_operand.vmem [shape: f32[8,1], index: 0, kind: input, shape index: {}]
  %s1 = inlined_call_operand.vmem [shape: f32[1,256], index: 1, kind: input, shape index: {}]
  %s2 = inlined_call_operand.vmem [shape: f32[1,256], index: 2, kind: input, shape index: {}]
  %s3 = inlined_call_operand.vmem [shape: f32[1,32], index: 3, kind: input, shape index: {}]
  %s4 = inlined_call_operand.hbm [shape: f32[256,32], index: 4, kind: input, shape index: {}]
  %s5 = inlined_call_operand.vmem [shape: f32[1,32], index: 5, kind: input, shape index: {}]
  %s6 = inlined_call_operand.hbm [shape: f32[8,32], index: 6, kind: output, shape index: {}]
  %s7 = sld [smem:[#allocation0]]
  $region38: #{_lambda_.1} parent=0
    _
  %s9 = ssub.s32 1, %s7
  %s10 = scalar_select 0, %s9, %s7
  $region1: #{_lambda_.1} parent=0
    #allocation2 [shape = 'u8[131072]{0}', space=vmem, size = 0x20000, scoped, tag = 'input window, operand 4, single buffered']
    #allocation3 [shape = 's32[1]{0}', space=sflag, size = 0x4, scoped, tag = 'scoped memory for _lambda_.1']
    #allocation4 [shape = 's32[1]{0}', space=sflag, size = 0x4, scoped, tag = 'scoped memory for _lambda_.1']
    #allocation5 [shape = 'u8[4096]{0}', space=vmem, size = 0x1000, scoped, tag = 'output window, operand 0, single buffered']
    %11 = vsyncpa [#allocation3], 0
    %12 = vsyncpa [#allocation4], 0
    // Predicated region
    $region2: #{_lambda_.1} parent=1 // pred_check
      _
    $region3: #{_lambda_.1} parent=1 // pred_check_branch
      %14 = sbr.rel (0) target = $region5
    $region4: #{_lambda_.1} parent=1 // pred_region
      _
    $region5: #{_lambda_.1} parent=1 // pred_fallthru
      _
    // Predicated region
    $region6: #{_lambda_.1} parent=1 // pred_check
      _
    $region7: #{_lambda_.1} parent=1 // pred_check_branch
      %16 = sbr.rel (0) target = $region9
    $region8: #{_lambda_.1} parent=1 // pred_region
      _
    $region9: #{_lambda_.1} parent=1 // pred_fallthru
      _
    // Predicated region
    $region10: #{_lambda_.1} parent=1 // pred_check
      _
    $region11: #{_lambda_.1} parent=1 // pred_check_branch
      %18 = sbr.rel (0) target = $region13
    $region12: #{_lambda_.1} parent=1 // pred_region
      _
    $region13: #{_lambda_.1} parent=1 // pred_fallthru
      _
    // Predicated region
    $region14: #{_lambda_.1} parent=1 // pred_check
      _
    $region15: #{_lambda_.1} parent=1 // pred_check_branch
      %20 = sbr.rel (0) target = $region17
    $region16: #{_lambda_.1} parent=1 // pred_region
      _
    $region17: #{_lambda_.1} parent=1 // pred_fallthru
      _
    // Predicated region
    $region18: #{_lambda_.1} parent=1 // pred_check
      _
    $region19: #{_lambda_.1} parent=1 // pred_check_branch
      %22 = sbr.rel (0) target = $region21
    $region20: #{_lambda_.1} parent=1 // pred_region
      %s24 = ssub.s32 4096, 4096
      %25 = vsyncadd [#allocation3], %s24
      %s26 = sshll.u32 [#allocation2], 4
      %s27 = int_to_ptr.vmem [resolvable:$true] %s26
      %32 = dma.hbm_to_vmem [thread:$0]  %s4, 4096, %s27, [#allocation3], 128, 128, 8
    $region21: #{_lambda_.1} parent=1 // pred_fallthru
      _
    // Predicated region
    $region22: #{_lambda_.1} parent=1 // pred_check
      _
    $region23: #{_lambda_.1} parent=1 // pred_check_branch
      %34 = sbr.rel (0) target = $region25
    $region24: #{_lambda_.1} parent=1 // pred_region
      _
    $region25: #{_lambda_.1} parent=1 // pred_fallthru
      _
    // Predicated region
    $region26: #{_lambda_.1} parent=1 // pred_check
      _
    $region27: #{_lambda_.1} parent=1 // pred_check_branch
      %36 = sbr.rel (0) target = $region29
    $region28: #{_lambda_.1} parent=1 // pred_region
      %37 = dma.done [#allocation3], 4096
    $region29: #{_lambda_.1} parent=1 // pred_fallthru
      _
    %v38 = vld [vmem:[%s0] sm:$0xff]
    %v39 = vmax.f32 %v38, 0.0
    %v40 = vmin.f32 %v39, 1.0
    %v41 = vld [vmem:[%s1] sm:$0x3]
    %43 = vset.pattern.permute.xlu0 0
    %44 = vperm.xlu0 %43, %v40
    %v45 = vpop.permute.xlu0 %44
    %v48 = vlaneseq
    %v49 = vshrl.u32 %v48, 7
    %v50 = vsub.s32 0, %v49
    %v51 = vrot.slane %v41, %v50
    %v52 = vlaneseq
    %v53 = vshrl.u32 %v52, 7
    %v54 = vsub.s32 1, %v53
    %v55 = vrot.slane %v41, %v54
    %v58 = vmul.f32 %v45, %v51
    %v59 = vmul.f32 %v45, %v55
    %v60 = vld [vmem:[%s2] sm:$0x3]
    %v62 = vlaneseq
    %v63 = vshrl.u32 %v62, 7
    %v64 = vsub.s32 0, %v63
    %v65 = vrot.slane %v60, %v64
    %v66 = vlaneseq
    %v67 = vshrl.u32 %v66, 7
    %v68 = vsub.s32 1, %v67
    %v69 = vrot.slane %v60, %v68
    %v72 = vadd.f32 %v58, %v65
    %v73 = vadd.f32 %v59, %v69
    %v74 = vand.u32 2147483647, %v72
    %vm75 = vcmp.le.f32.partialorder %v74, 0.7853982
    %vm76 = vcmp.lt.s32.totalorder %v72, 0
    %v77 = vand.u32 %v72, 2139095040
    %v78 = vshrl.u32 %v77, 23
    %v79 = vsub.s32 %v78, 127
    %v80 = vand.u32 2147483647, %v72
    %v81 = vand.u32 %v80, 8388607
    %v82 = vor.u32 %v81, 8388608
    %v83 = vsub.s32 0, %v82
    %v84 = vadd.s32 %v79, 1
    %vm85 = vcmp.gt.s32.totalorder %v84, 0
    %v86 = vsel %vm85, %v84, 0
    %v87 = vshrl.u32 %v86, 5
    %v88 = vand.u32 %v86, 31
    %v89 = vsub.s32 32, %v88
    %v90 = vshrl.u32 683565275, %v89
    %v91 = vshll.u32 683565275, %v88
    %v92 = vshrl.u32 2475754826, %v89
    %v93 = vor.u32 %v91, %v92
    %v94 = vshll.u32 2475754826, %v88
    %v95 = vshrl.u32 2131351028, %v89
    %v96 = vor.u32 %v94, %v95
    %v97 = vshll.u32 2131351028, %v88
    %v98 = vshrl.u32 2102212464, %v89
    %v99 = vor.u32 %v97, %v98
    %v100 = vshll.u32 2102212464, %v88
    %v101 = vshrl.u32 920167782, %v89
    %v102 = vor.u32 %v100, %v101
    %v103 = vshll.u32 920167782, %v88
    %v104 = vshrl.u32 1326507024, %v89
    %v105 = vor.u32 %v103, %v104
    %vm106 = vcmp.lt.s32.totalorder %v87, 1
    %vm107 = vcmp.lt.s32.totalorder %v87, 2
    %vm108 = vcmp.lt.s32.totalorder %v87, 3
    %vm109 = vcmp.lt.s32.totalorder %v87, 4
    %v110 = vsel %vm106, %v90, %v93
    %v111 = vsel %vm109, %v99, 2102212464
    %v112 = vsel %vm108, %v96, %v111
    %v113 = vsel %vm107, %v110, %v112
    %v114 = vsel %vm106, %v93, %v96
    %v115 = vsel %vm109, %v102, 920167782
    %v116 = vsel %vm108, %v99, %v115
    %v117 = vsel %vm107, %v114, %v116
    %v118 = vsel %vm106, %v96, %v99
    %v119 = vsel %vm109, %v105, 1326507024
    %v120 = vsel %vm108, %v102, %v119
    %v121 = vsel %vm107, %v118, %v120
    %v122 = vshll.u32 %v82, 8
    %v123 = vmul.u32.u64.compose %v122, %v121
    %v124 = vextract.low.u32 %v123
    %v125 = vextract.high.u32 %v123
    %v126 = vmul.u32.u64.compose %v122, %v117
    %v127 = vextract.low.u32 %v126
    %v128 = vextract.high.u32 %v126
    %v129 = vmul.u32 %v122, %v113
    %v130 = vadd.s32 %v125, %v127
    %vm131 = vc.u32 %v125, %v127
    %v132 = vadd.s32 %v128, 1
    %v133 = vsel %vm131, %v132, %v128
    %v134 = vadd.s32 %v129, %v133
    %v135 = vadd.s32 %v134, 536870912
    %v136 = vshrl.u32 %v135, 30
    %v137 = vshll.u32 %v136, 30
    %v138 = vsub.s32 %v134, %v137
    %vm139 = vcmp.lt.s32.totalorder %v138, 0
    %v140 = vsub.s32 0, %v138
    %v141 = vsel %vm139, %v140, %v138
    %v142 = vclz %v141
    %v143 = vsub.s32 %v142, 2
    %vm144 = vcmp.gt.s32.totalorder 0, %v143
    %v145 = vsel %vm144, 0, %v143
    %v146 = vsub.s32 32, %v145
    %v147 = vshll.u32 %v138, %v145
    %v148 = vshrl.u32 %v130, %v146
    %v149 = vor.u32 %v147, %v148
    %v150 = vsub.s32 4294967266, %v145
    %v151 = vadd.s32 %v150, 127
    %v152 = vshll.u32 %v151, 23
    %v153 = vor.u32 4788187, %v152
    %v154 = vand.u32 2147483647, %v153
    %v156 = vcvt.s32.f32 %v149
    %v157 = vmul.f32 %v156, %v154
    %v158 = vxor.u32 %v157, 2147483648
    %v159 = vsel %vm76, %v158, %v157
    %v160 = vsub.s32 4, %v136
    %v161 = vsel %vm76, %v160, %v136
    %v162 = vsel %vm75, %v72, %v159
    %v163 = vsel %vm75, 0, %v161
    %v164 = vcosq.f32.pop %v162
    %v165 = vsinq.f32.pop %v162
    %vm166 = vweird.f32 %v72
    %v167 = vadd.s32 %v163, 3
    %v168 = vand.u32 %v167, 3
    %vm169 = vcmp.lt.s32.totalorder %v168, 2
    %vm170 = vcmp.eq.s32.totalorder %v168, 0
    %v171 = vxor.u32 %v165, 2147483648
    %v172 = vsel %vm170, %v164, %v171
    %vm173 = vcmp.eq.s32.totalorder %v168, 2
    %v174 = vxor.u32 %v164, 2147483648
    %v175 = vsel %vm173, %v174, %v165
    %v176 = vsel %vm169, %v172, %v175
    %v177 = vsel %vm166, nan, %v176
    %v178 = vand.u32 2147483647, %v73
    %vm179 = vcmp.le.f32.partialorder %v178, 0.7853982
    %vm180 = vcmp.lt.s32.totalorder %v73, 0
    %v181 = vand.u32 %v73, 2139095040
    %v182 = vshrl.u32 %v181, 23
    %v183 = vsub.s32 %v182, 127
    %v184 = vand.u32 2147483647, %v73
    %v185 = vand.u32 %v184, 8388607
    %v186 = vor.u32 %v185, 8388608
    %v187 = vsub.s32 0, %v186
    %v188 = vadd.s32 %v183, 1
    %vm189 = vcmp.gt.s32.totalorder %v188, 0
    %v190 = vsel %vm189, %v188, 0
    %v191 = vshrl.u32 %v190, 5
    %v192 = vand.u32 %v190, 31
    %v193 = vsub.s32 32, %v192
    %v194 = vshrl.u32 683565275, %v193
    %v195 = vshll.u32 683565275, %v192
    %v196 = vshrl.u32 2475754826, %v193
    %v197 = vor.u32 %v195, %v196
    %v198 = vshll.u32 2475754826, %v192
    %v199 = vshrl.u32 2131351028, %v193
    %v200 = vor.u32 %v198, %v199
    %v201 = vshll.u32 2131351028, %v192
    %v202 = vshrl.u32 2102212464, %v193
    %v203 = vor.u32 %v201, %v202
    %v204 = vshll.u32 2102212464, %v192
    %v205 = vshrl.u32 920167782, %v193
    %v206 = vor.u32 %v204, %v205
    %v207 = vshll.u32 920167782, %v192
    %v208 = vshrl.u32 1326507024, %v193
    %v209 = vor.u32 %v207, %v208
    %vm210 = vcmp.lt.s32.totalorder %v191, 1
    %vm211 = vcmp.lt.s32.totalorder %v191, 2
    %vm212 = vcmp.lt.s32.totalorder %v191, 3
    %vm213 = vcmp.lt.s32.totalorder %v191, 4
    %v214 = vsel %vm210, %v194, %v197
    %v215 = vsel %vm213, %v203, 2102212464
    %v216 = vsel %vm212, %v200, %v215
    %v217 = vsel %vm211, %v214, %v216
    %v218 = vsel %vm210, %v197, %v200
    %v219 = vsel %vm213, %v206, 920167782
    %v220 = vsel %vm212, %v203, %v219
    %v221 = vsel %vm211, %v218, %v220
    %v222 = vsel %vm210, %v200, %v203
    %v223 = vsel %vm213, %v209, 1326507024
    %v224 = vsel %vm212, %v206, %v223
    %v225 = vsel %vm211, %v222, %v224
    %v226 = vshll.u32 %v186, 8
    %v227 = vmul.u32.u64.compose %v226, %v225
    %v228 = vextract.low.u32 %v227
    %v229 = vextract.high.u32 %v227
    %v230 = vmul.u32.u64.compose %v226, %v221
    %v231 = vextract.low.u32 %v230
    %v232 = vextract.high.u32 %v230
    %v233 = vmul.u32 %v226, %v217
    %v234 = vadd.s32 %v229, %v231
    %vm235 = vc.u32 %v229, %v231
    %v236 = vadd.s32 %v232, 1
    %v237 = vsel %vm235, %v236, %v232
    %v238 = vadd.s32 %v233, %v237
    %v239 = vadd.s32 %v238, 536870912
    %v240 = vshrl.u32 %v239, 30
    %v241 = vshll.u32 %v240, 30
    %v242 = vsub.s32 %v238, %v241
    %vm243 = vcmp.lt.s32.totalorder %v242, 0
    %v244 = vsub.s32 0, %v242
    %v245 = vsel %vm243, %v244, %v242
    %v246 = vclz %v245
    %v247 = vsub.s32 %v246, 2
    %vm248 = vcmp.gt.s32.totalorder 0, %v247
    %v249 = vsel %vm248, 0, %v247
    %v250 = vsub.s32 32, %v249
    %v251 = vshll.u32 %v242, %v249
    %v252 = vshrl.u32 %v234, %v250
    %v253 = vor.u32 %v251, %v252
    %v254 = vsub.s32 4294967266, %v249
    %v255 = vadd.s32 %v254, 127
    %v256 = vshll.u32 %v255, 23
    %v257 = vor.u32 4788187, %v256
    %v258 = vand.u32 2147483647, %v257
    %v260 = vcvt.s32.f32 %v253
    %v261 = vmul.f32 %v260, %v258
    %v262 = vxor.u32 %v261, 2147483648
    %v263 = vsel %vm180, %v262, %v261
    %v264 = vsub.s32 4, %v240
    %v265 = vsel %vm180, %v264, %v240
    %v266 = vsel %vm179, %v73, %v263
    %v267 = vsel %vm179, 0, %v265
    %v268 = vcosq.f32.pop %v266
    %v269 = vsinq.f32.pop %v266
    %vm270 = vweird.f32 %v73
    %v271 = vadd.s32 %v267, 3
    %v272 = vand.u32 %v271, 3
    %vm273 = vcmp.lt.s32.totalorder %v272, 2
    %vm274 = vcmp.eq.s32.totalorder %v272, 0
    %v275 = vxor.u32 %v269, 2147483648
    %v276 = vsel %vm274, %v268, %v275
    %vm277 = vcmp.eq.s32.totalorder %v272, 2
    %v278 = vxor.u32 %v268, 2147483648
    %v279 = vsel %vm277, %v278, %v269
    %v280 = vsel %vm273, %v276, %v279
    %v281 = vsel %vm270, nan, %v280
    %v282 = vld [vmem:[%s3] sm:$0x1]
    %v284 = vlaneseq
    %v285 = vshrl.u32 %v284, 7
    %v286 = vsub.s32 0, %v285
    %v287 = vrot.slane %v282, %v286
    %v289 = vmul.f32 %v45, %v287
    %v290 = vld [vmem:[#allocation2] sm:$0xff]
    %v291 = vld [vmem:[#allocation2 + $0x8] sm:$0xff]
    %v292 = vld [vmem:[#allocation2 + $0x10] sm:$0xff]
    %v293 = vld [vmem:[#allocation2 + $0x18] sm:$0xff]
    %v294 = vld [vmem:[#allocation2 + $0x20] sm:$0xff]
    %v295 = vld [vmem:[#allocation2 + $0x28] sm:$0xff]
    %v296 = vld [vmem:[#allocation2 + $0x30] sm:$0xff]
    %v297 = vld [vmem:[#allocation2 + $0x38] sm:$0xff]
    %v298 = vld [vmem:[#allocation2 + $0x40] sm:$0xff]
    %v299 = vld [vmem:[#allocation2 + $0x48] sm:$0xff]
    %v300 = vld [vmem:[#allocation2 + $0x50] sm:$0xff]
    %v301 = vld [vmem:[#allocation2 + $0x58] sm:$0xff]
    %v302 = vld [vmem:[#allocation2 + $0x60] sm:$0xff]
    %v303 = vld [vmem:[#allocation2 + $0x68] sm:$0xff]
    %v304 = vld [vmem:[#allocation2 + $0x70] sm:$0xff]
    %v305 = vld [vmem:[#allocation2 + $0x78] sm:$0xff]
    %v306 = vld [vmem:[#allocation2 + $0x80] sm:$0xff]
    %v307 = vld [vmem:[#allocation2 + $0x88] sm:$0xff]
    %v308 = vld [vmem:[#allocation2 + $0x90] sm:$0xff]
    %v309 = vld [vmem:[#allocation2 + $0x98] sm:$0xff]
    %v310 = vld [vmem:[#allocation2 + $0xa0] sm:$0xff]
    %v311 = vld [vmem:[#allocation2 + $0xa8] sm:$0xff]
    %v312 = vld [vmem:[#allocation2 + $0xb0] sm:$0xff]
    %v313 = vld [vmem:[#allocation2 + $0xb8] sm:$0xff]
    %v314 = vld [vmem:[#allocation2 + $0xc0] sm:$0xff]
    %v315 = vld [vmem:[#allocation2 + $0xc8] sm:$0xff]
    %v316 = vld [vmem:[#allocation2 + $0xd0] sm:$0xff]
    %v317 = vld [vmem:[#allocation2 + $0xd8] sm:$0xff]
    %v318 = vld [vmem:[#allocation2 + $0xe0] sm:$0xff]
    %v319 = vld [vmem:[#allocation2 + $0xe8] sm:$0xff]
    %v320 = vld [vmem:[#allocation2 + $0xf0] sm:$0xff]
    %v321 = vld [vmem:[#allocation2 + $0xf8] sm:$0xff]
    %322 = vmatprep.subr.mxu0 0.0
    %323 = vmatpush1.msra.mxu0 %v290
    %324 = vmatprep.subr.mxu0 0.0
    %325 = vmatpush1.msra.mxu0 %v291
    %326 = vmatprep.subr.mxu0 0.0
    %327 = vmatpush1.msra.mxu0 %v292
    %328 = vmatprep.subr.mxu0 0.0
    %329 = vmatpush1.msra.mxu0 %v293
    %330 = vmatprep.subr.mxu0 0.0
    %331 = vmatpush1.msra.mxu0 %v294
    %332 = vmatprep.subr.mxu0 0.0
    %333 = vmatpush1.msra.mxu0 %v295
    %334 = vmatprep.subr.mxu0 0.0
    %335 = vmatpush1.msra.mxu0 %v296
    %336 = vmatprep.subr.mxu0 0.0
    %337 = vmatpush1.msra.mxu0 %v297
    %338 = vmatprep.subr.mxu0 0.0
    %339 = vmatpush1.msra.mxu0 %v298
    %340 = vmatprep.subr.mxu0 0.0
    %341 = vmatpush1.msra.mxu0 %v299
    %342 = vmatprep.subr.mxu0 0.0
    %343 = vmatpush1.msra.mxu0 %v300
    %344 = vmatprep.subr.mxu0 0.0
    %345 = vmatpush1.msra.mxu0 %v301
    %346 = vmatprep.subr.mxu0 0.0
    %347 = vmatpush1.msra.mxu0 %v302
    %348 = vmatprep.subr.mxu0 0.0
    %349 = vmatpush1.msra.mxu0 %v303
    %350 = vmatprep.subr.mxu0 0.0
    %351 = vmatpush1.msra.mxu0 %v304
    %352 = vmatprep.subr.mxu0 0.0
    %353 = vmatpush1.msra.mxu0 %v305
    %354 = vmatprep.subr.mxu0 0.0
    %355 = vmatpush1.msra.mxu0 %v306
    %356 = vmatprep.subr.mxu0 0.0
    %357 = vmatpush1.msra.mxu0 %v307
    %358 = vmatprep.subr.mxu0 0.0
    %359 = vmatpush1.msra.mxu0 %v308
    %360 = vmatprep.subr.mxu0 0.0
    %361 = vmatpush1.msra.mxu0 %v309
    %362 = vmatprep.subr.mxu0 0.0
    %363 = vmatpush1.msra.mxu0 %v310
    %364 = vmatprep.subr.mxu0 0.0
    %365 = vmatpush1.msra.mxu0 %v311
    %366 = vmatprep.subr.mxu0 0.0
    %367 = vmatpush1.msra.mxu0 %v312
    %368 = vmatprep.subr.mxu0 0.0
    %369 = vmatpush1.msra.mxu0 %v313
    %370 = vmatprep.subr.mxu0 0.0
    %371 = vmatpush1.msra.mxu0 %v314
    %372 = vmatprep.subr.mxu0 0.0
    %373 = vmatpush1.msra.mxu0 %v315
    %374 = vmatprep.subr.mxu0 0.0
    %375 = vmatpush1.msra.mxu0 %v316
    %376 = vmatprep.subr.mxu0 0.0
    %377 = vmatpush1.msra.mxu0 %v317
    %378 = vmatprep.subr.mxu0 0.0
    %379 = vmatpush1.msra.mxu0 %v318
    %380 = vmatprep.subr.mxu0 0.0
    %381 = vmatpush1.msra.mxu0 %v319
    %382 = vmatprep.subr.mxu0 0.0
    %383 = vmatpush1.msra.mxu0 %v320
    %384 = vmatprep.subr.mxu0 0.0
    %385 = vmatpush1.msra.mxu0 %v321
    %386 = vmatprep.mubr.f32.mxu0 %v281
    %387 = vmatmul.mubr.f32.gmra.mrb[0].mxu0 %v177
    %v388 = vpop.f32.mrb[0].mxu0
    %v389 = vadd.f32 0.0, %v388
    %v390 = vpop.f32.mrb[0].mxu0
    %391 = vdwg.mxu0
    %v392 = vadd.f32 %v289, %v389
    %v393 = vld [vmem:[%s5] sm:$0x1]
    %v395 = vlaneseq
    %v396 = vshrl.u32 %v395, 7
    %v397 = vsub.s32 0, %v396
    %v398 = vrot.slane %v393, %v397
    %v400 = vadd.f32 %v392, %v398
    %vm401 = vcmask 261120
    %402 = vst.msk [vmem:[#allocation5] sm:$0xff] %vm401, %v400
    // Predicated region
    $region30: #{_lambda_.1} parent=1 // pred_check
      _
    $region31: #{_lambda_.1} parent=1 // pred_check_branch
      %404 = sbr.rel (0) target = $region33
    $region32: #{_lambda_.1} parent=1 // pred_region
      %s406 = ssub.s32 128, 128
      %407 = vsyncadd [#allocation4], %s406
      %s409 = sshll.u32 [#allocation5], 4
      %s410 = int_to_ptr.vmem [resolvable:$true] %s409
      %412 = dma.vmem_to_hbm [thread:$0]  %s410, 128, %s6, [#allocation4]
    $region33: #{_lambda_.1} parent=1 // pred_fallthru
      _
    // Predicated region
    $region34: #{_lambda_.1} parent=1 // pred_check
      _
    $region35: #{_lambda_.1} parent=1 // pred_check_branch
      %414 = sbr.rel (0) target = $region37
    $region36: #{_lambda_.1} parent=1 // pred_region
      %415 = dma.done [#allocation4], 128
    $region37: #{_lambda_.1} parent=1 // pred_fallthru
      _
    %416 = vsyncpa [#allocation3], 1
    %417 = vsyncpa [#allocation4], 1

</llo_original>
